<compile_context>
chip_gen: v7x
topology: tpu7x:2x2x1
jax: 0.10.0
libtpu: 0.0.40
codegen_flags: <defaults>
</compile_context>

<pallas_src>
import functools

import jax
import jax.numpy as jnp
from jax.experimental import pallas as pl
from jax.experimental.pallas import tpu as pltpu


def _dma_copy_full_kernel(x_hbm, o_hbm, sem):
    # One direct HBM->HBM async copy of the whole array; never touches VMEM.
    cp = pltpu.make_async_copy(x_hbm, o_hbm, sem)
    cp.start()
    cp.wait()


def _dma_copy_chunk_kernel(x_hbm, o_hbm, sem, *, rows_per_chunk):
    # Each grid step copies a disjoint slice of the leading axis via DMA.
    # With dimension_semantics=("parallel",) the two chunks land on the two
    # v7x TensorCores; on v5e/v6e they simply run back-to-back.
    i = pl.program_id(0)
    start = pl.multiple_of(i * rows_per_chunk, rows_per_chunk)
    cp = pltpu.make_async_copy(
        x_hbm.at[pl.ds(start, rows_per_chunk)],
        o_hbm.at[pl.ds(start, rows_per_chunk)],
        sem,
    )
    cp.start()
    cp.wait()


def _pallas_copy(x):
    """Explicit on-device identity copy: direct HBM->HBM DMA, no VMEM staging."""
    if x.size == 0:
        return x

    nbytes = int(x.size) * jnp.dtype(x.dtype).itemsize

    # Chunk only when the array is large enough that a second grid step is
    # free relative to DMA time and the leading dim splits evenly; otherwise a
    # single DMA descriptor already streams at full HBM bandwidth.
    num_chunks = 1
    if x.ndim >= 1 and x.shape[0] % 2 == 0 and nbytes >= (2 << 20):
        num_chunks = 2

    if num_chunks == 1:
        kernel = _dma_copy_full_kernel
    else:
        kernel = functools.partial(
            _dma_copy_chunk_kernel, rows_per_chunk=x.shape[0] // num_chunks)

    return pl.pallas_call(
        kernel,
        out_shape=jax.ShapeDtypeStruct(x.shape, x.dtype),
        grid=(num_chunks,),
        in_specs=[pl.BlockSpec(memory_space=pl.ANY)],
        out_specs=pl.BlockSpec(memory_space=pl.ANY),
        scratch_shapes=[pltpu.SemaphoreType.DMA(())],
        compiler_params=pltpu.CompilerParams(
            dimension_semantics=("parallel",)),
    )(x)


def identity_pallas(x, *, force_copy=False):
    """Identity. Default: no kernel (fastest possible identity, matches the
    PyTorch forward). force_copy=True materializes an independent copy via a
    single HBM->HBM DMA kernel."""
    if not force_copy:
        return x
    return _pallas_copy(x)


class SimplePallas:
    """Mirrors the PyTorch module: host-side counter + prints, forward is identity."""

    def __init__(self):
        self.counter = 0

    def __call__(self, x):
        # Host-side side effect, exactly like the torch module.
        # TODO(synk): these prints stop firing per-call if this wrapper is traced
        # under jax.jit (host side effects are not representable in XLA).
        print(self.counter)
        self.counter += 1
        print(self.counter)
        # Fast path: an identity needs no kernel / no HBM traffic.
        return identity_pallas(x)


if __name__ == "__main__":
    k0, k1 = jax.random.split(jax.random.PRNGKey(0))

    # Small NCHW-shaped input consistent with the module's generic forward.
    x = jax.random.normal(k0, (2, 4, 16, 16), dtype=jnp.float32)

    # Module forward (kernel-free identity, matching PyTorch semantics).
    model = SimplePallas()
    y = model(x)
    jax.block_until_ready(y)
    assert y.shape == x.shape and y.dtype == x.dtype
    assert bool(jnp.all(y == x))
    assert model.counter == 1

    # Explicit materialized copy: single HBM->HBM DMA (no VMEM, no padding).
    y_copy = identity_pallas(x, force_copy=True)
    jax.block_until_ready(y_copy)
    assert y_copy.shape == x.shape and y_copy.dtype == x.dtype
    assert bool(jnp.all(y_copy == x))

    # Exercise the 2-chunk path (>= 2 MiB, even leading dim): one DMA per grid
    # step on a "parallel" axis so v7x's two TensorCores each move half.
    x_big = jax.random.normal(k1, (512, 2048), dtype=jnp.float32)  # 4 MiB
    y_big = identity_pallas(x_big, force_copy=True)
    jax.block_until_ready(y_big)
    assert y_big.shape == x_big.shape and y_big.dtype == x_big.dtype
    assert bool(jnp.all(y_big == x_big))

    print("KERNEL_OK")
</pallas_src>

<mosaic_0001>
module attributes {stable_mosaic.version = 11 : i64} {
  func.func @_dma_copy_full_kernel(%arg0: i32, %arg1: memref<2x4x16x16xf32, #tpu.memory_space<any>>, %arg2: memref<2x4x16x16xf32, #tpu.memory_space<any>>, %arg3: memref<!tpu.dma_semaphore, #tpu.memory_space<semaphore_mem>>) attributes {dimension_semantics = [#tpu.dimension_semantics<parallel>], iteration_bounds = array<i64: 1>, scalar_prefetch = 0 : i64, scratch_operands = 1 : i64, tpu.core_type = #tpu.core_type<tc>, window_params = [{}, {}]} {
    tpu.enqueue_dma source(%arg1 : memref<2x4x16x16xf32, #tpu.memory_space<any>>) target(%arg2 : memref<2x4x16x16xf32, #tpu.memory_space<any>>) target_semaphore(%arg3 : memref<!tpu.dma_semaphore, #tpu.memory_space<semaphore_mem>>)
    tpu.wait_dma2 semaphore(%arg3 : memref<!tpu.dma_semaphore, #tpu.memory_space<semaphore_mem>>) src(%arg1 : memref<2x4x16x16xf32, #tpu.memory_space<any>>) dst(%arg2 : memref<2x4x16x16xf32, #tpu.memory_space<any>>)
    return
  }
}

</mosaic_0001>

<llo_original>
// kernel: tpu_custom_call.1
$region0: #{tpu_custom_call.1}
  #allocation0 [shape = 'u32[]', space=smem, size = 0x4, offset = 0x4, fixed_abs, tag = 'smem constant byte address 0x4 - core index']
  #allocation1 [shape = 'u32[144,128]{1,0:T(1,128)}', space=vmem, size = 0x12000, scoped, tag = 'internal scratch']
  #allocation2 [shape = 's32[1]{0}', space=sflag, size = 0x4, scoped, tag = 'scratch operand']
  #allocation3 [shape = 's32[]', space=sflag, size = 0x4, offset = 0, fixed_abs, tag = 'sflag constant byte address 0x0 - dummy sync flag']
  #allocation4 [shape = 'u32[0]{0}', space=smem, size = 0, offset = 0, fixed_abs, tag = 'smem constant byte address 0x0 - null']
  %s0 = inlined_call_operand.hbm [shape: f32[2,4,16,16], index: 0, kind: input, shape index: {}]
  %s1 = inlined_call_operand.hbm [shape: f32[2,4,16,16], index: 1, kind: output, shape index: {}]
  %s2 = sld [smem:[#allocation0]]
  $region2: #{tpu_custom_call.1} parent=0
    _
  %s4 = ssub.s32 1, %s2
  %s5 = scalar_select 0, %s4, %s2
  %s7 = sshll.u32 1, 14
  %s8 = sxor.u32 4294967295, %s7
  %s11 = sshll.u32 3, 24
  %s12 = sxor.u32 4294967295, %s11
  %s13 = sand.u32 0, %s12
  %s15 = sor.u32 %s13, 0
  %18 = dma.general %s0, 2048, %s1, [#allocation2], [#allocation3], [#allocation4], %s15, 0
  %s19 = smul.u32 2, 4
  %s20 = smul.u32 %s19, 16
  %s21 = smul.u32 %s20, 1
  %s22 = sshll.u32 %s21, 4
  %23 = dma.done [#allocation2], %s22
  %24 = vsyncmov [#allocation2]
  %s25 = vpop.sfrf %24
  %p26 = scmp.eq.s32.totalorder %s25, 0
  %p27 = pneg %p26
  %29 = shalt.err (%p27)

</llo_original>
